<compile_context>
chip_gen: v7x
topology: tpu7x:2x2x1
jax: 0.10.0
libtpu: 0.0.40
codegen_flags: <defaults>
</compile_context>

<pallas_src>
from functools import partial

import jax
import jax.numpy as jnp
from jax.experimental import pallas as pl
from jax.experimental.pallas import tpu as pltpu

_BN_EPS = 1e-5
_LANE = 128     # TPU lane width: channel / K dims padded to multiples of this
_SUBLANE = 8    # f32 sublane count: M dims padded to multiples of this
_MAX_TM = 512   # M-tile cap (review: <=512, sized for v7x's 64 MiB VMEM)
_MAX_TNK = 256  # N / K tile caps


def _round_up(x, m):
    return (x + m - 1) // m * m


def _m_tiling(m):
    """(tile_m, padded_M): largest tile <= _MAX_TM with padded M divisible by it."""
    mp = _round_up(m, _SUBLANE)
    tm = min(_MAX_TM, mp)
    return tm, _round_up(m, tm)


# ----------------------------- Pallas kernels ------------------------------
# Both kernels compute   out = epilogue( sum_{t,k} A[t] @ W[t] )   with the
# reduction spread over the last two grid axes (taps, K-tiles).  The f32
# accumulator lives in VMEM scratch; the epilogue (BN scale/shift, optional
# ReLU, optional residual add + ReLU) runs only on the final reduction step.

def _matmul_bn_kernel(a_ref, w_ref, s_ref, b_ref, o_ref, acc_ref, *, relu):
    t, k = pl.program_id(2), pl.program_id(3)

    @pl.when((t == 0) & (k == 0))
    def _():
        acc_ref[...] = jnp.zeros_like(acc_ref)

    acc_ref[...] += jnp.dot(a_ref[...], w_ref[...],
                            preferred_element_type=jnp.float32)

    @pl.when((t == pl.num_programs(2) - 1) & (k == pl.num_programs(3) - 1))
    def _():
        y = acc_ref[...] * s_ref[...] + b_ref[...]
        if relu:
            y = jnp.maximum(y, 0.0)
        o_ref[...] = y.astype(o_ref.dtype)


def _matmul_bn_res_relu_kernel(a_ref, w_ref, s_ref, b_ref, r_ref, o_ref, acc_ref):
    t, k = pl.program_id(2), pl.program_id(3)

    @pl.when((t == 0) & (k == 0))
    def _():
        acc_ref[...] = jnp.zeros_like(acc_ref)

    acc_ref[...] += jnp.dot(a_ref[...], w_ref[...],
                            preferred_element_type=jnp.float32)

    @pl.when((t == pl.num_programs(2) - 1) & (k == pl.num_programs(3) - 1))
    def _():
        y = acc_ref[...] * s_ref[...] + b_ref[...] + r_ref[...]
        o_ref[...] = jnp.maximum(y, 0.0).astype(o_ref.dtype)


def _fused_matmul(a, w, scale, shift, *, relu, residual=None):
    """a: (T, Mp, Kp) bf16, w: (T, Kp, Np) bf16, scale/shift: (1, Np) f32,
    residual: (Mp, Np) f32 or None.  Returns (Mp, Np) f32."""
    T, Mp, Kp = a.shape
    Np = w.shape[-1]
    tm = min(_MAX_TM, Mp)
    tn = _MAX_TNK if Np % _MAX_TNK == 0 else _LANE
    tk = _MAX_TNK if Kp % _MAX_TNK == 0 else _LANE
    assert Mp % tm == 0 and Np % tn == 0 and Kp % tk == 0, (Mp, Np, Kp)

    grid = (Mp // tm, Np // tn, T, Kp // tk)

    a_spec = pl.BlockSpec((None, tm, tk), lambda i, j, t, k: (t, i, k))
    w_spec = pl.BlockSpec((None, tk, tn), lambda i, j, t, k: (t, k, j))
    v_spec = pl.BlockSpec((1, tn), lambda i, j, t, k: (0, j))
    o_spec = pl.BlockSpec((tm, tn), lambda i, j, t, k: (i, j))

    if residual is None:
        kernel = partial(_matmul_bn_kernel, relu=relu)
        in_specs = [a_spec, w_spec, v_spec, v_spec]
        args = (a, w, scale, shift)
    else:
        kernel = _matmul_bn_res_relu_kernel
        in_specs = [a_spec, w_spec, v_spec, v_spec, o_spec]
        args = (a, w, scale, shift, residual)

    return pl.pallas_call(
        kernel,
        grid=grid,
        in_specs=in_specs,
        out_specs=o_spec,
        out_shape=jax.ShapeDtypeStruct((Mp, Np), jnp.float32),
        scratch_shapes=[pltpu.VMEM((tm, tn), jnp.float32)],
        compiler_params=pltpu.CompilerParams(
            dimension_semantics=("parallel", "parallel", "arbitrary", "arbitrary"),
            vmem_limit_bytes=48 * 1024 * 1024,  # headroom vs v7x's 64 MiB VMEM
        ),
    )(*args)


# ------------------------------- glue (JAX) --------------------------------

def _conv_taps(x_nhwc, k, stride):
    """k x k conv as k*k tap-shifted (M, Cin) matmul operands (tap-major)."""
    n, h, w, c = x_nhwc.shape
    pad = k // 2
    xp = jnp.pad(x_nhwc, ((0, 0), (pad, pad), (pad, pad), (0, 0)))
    ho = (h + 2 * pad - k) // stride + 1
    wo = (w + 2 * pad - k) // stride + 1
    taps = [xp[:, di:di + ho * stride:stride, dj:dj + wo * stride:stride, :]
            for di in range(k) for dj in range(k)]
    a = jnp.stack(taps, axis=0).reshape(k * k, n * ho * wo, c)
    return a, (n, ho, wo)


def _conv_bn(x_nhwc, p, *, stride, relu, residual=None):
    """ResNetConvLayer (conv + eval-BN [+ReLU] [+residual add+ReLU]) via Pallas."""
    k, cin, cout = p["k"], p["cin"], p["cout"]
    Kp, Np = p["Kp"], p["Np"]
    if k == 1:
        # 1x1 conv: no im2col — stride is pure spatial subsampling + reshape.
        xs = x_nhwc[:, ::stride, ::stride, :] if stride > 1 else x_nhwc
        n, ho, wo, _ = xs.shape
        a = xs.reshape(1, n * ho * wo, cin)
    else:
        a, (n, ho, wo) = _conv_taps(x_nhwc, k, stride)
    m = n * ho * wo
    _, Mp = _m_tiling(m)
    # Lane-dense padding (K, Cout -> multiples of 128; M -> tile multiple) and
    # bf16 cast for the MXU.  Accumulation / epilogue stay in f32.
    a = jnp.pad(a, ((0, 0), (0, Mp - m), (0, Kp - cin))).astype(jnp.bfloat16)
    res = None
    if residual is not None:
        res = jnp.pad(residual.reshape(m, cout).astype(jnp.float32),
                      ((0, Mp - m), (0, Np - cout)))
    out = _fused_matmul(a, p["wmat"], p["scale_p"], p["shift_p"],
                        relu=relu, residual=res)
    return out[:m, :cout].reshape(n, ho, wo, cout)


def _maxpool_3x3_s2(x_nhwc):
    # nn.MaxPool2d(kernel_size=3, stride=2, padding=1) — tiny op, plain-JAX glue.
    return jax.lax.reduce_window(
        x_nhwc, -jnp.inf, jax.lax.max,
        window_dimensions=(1, 3, 3, 1), window_strides=(1, 2, 2, 1),
        padding=((0, 0), (1, 1), (1, 1), (0, 0)))


def _linear(x, cp):
    """nn.Linear via the same fused Pallas matmul (scale=1, shift=bias)."""
    n, hidden = x.shape
    Kp = cp["Kp"]
    _, Mp = _m_tiling(n)
    a = jnp.pad(x, ((0, Mp - n), (0, Kp - hidden))).astype(jnp.bfloat16)[None]
    out = _fused_matmul(a, cp["wmat"], cp["scale"], cp["shift"], relu=False)
    return out[:n, :cp["nl"]]


# --------------------------- parameter construction ------------------------

def _make_conv_bn_params(key, cin, cout, k):
    """Conv2d(cin,cout,k,bias=False) + BatchNorm2d(cout) (eval mode).  Weight is
    pre-reshaped once to tap-major padded bf16 (k*k, Kp, Np); BN folded to
    per-channel scale/shift (no per-forward layout work)."""
    kw, kg, kb, km, kv = jax.random.split(key, 5)
    w = 0.1 * jax.random.normal(kw, (cout, cin, k, k), jnp.float32)  # OIHW
    gamma = 1.0 + 0.1 * jax.random.normal(kg, (cout,), jnp.float32)
    beta = 0.1 * jax.random.normal(kb, (cout,), jnp.float32)
    mean = 0.05 * jax.random.normal(km, (cout,), jnp.float32)
    var = 1.0 + 0.1 * jax.random.uniform(kv, (cout,), jnp.float32)
    scale = gamma / jnp.sqrt(var + _BN_EPS)
    shift = beta - mean * scale

    Kp, Np = _round_up(cin, _LANE), _round_up(cout, _LANE)
    wmat = jnp.transpose(w, (2, 3, 1, 0)).reshape(k * k, cin, cout)  # (taps,Cin,Cout)
    wmat = jnp.pad(wmat, ((0, 0), (0, Kp - cin), (0, Np - cout))).astype(jnp.bfloat16)
    return {"k": k, "cin": cin, "cout": cout, "Kp": Kp, "Np": Np,
            "wmat": wmat,
            "scale_p": jnp.pad(scale, (0, Np - cout)).reshape(1, Np),
            "shift_p": jnp.pad(shift, (0, Np - cout)).reshape(1, Np),
            # raw params kept only for the pure-JAX reference
            "w": w, "gamma": gamma, "beta": beta, "mean": mean, "var": var}


def _make_stage_params(key, in_channels, out_channels, depth, stride,
                       layer_type, reduction):
    layers = []
    for d in range(depth):
        cin = in_channels if d == 0 else out_channels
        s = stride if d == 0 else 1
        needs_res = (cin != out_channels) or (s != 1)
        key, k0, k1, k2, k3 = jax.random.split(key, 5)
        lp = {"stride": s,
              "residual": (_make_conv_bn_params(k0, cin, out_channels, 1)
                           if needs_res else None)}
        if layer_type == "bottleneck":
            bott = out_channels // reduction
            lp["conv1"] = _make_conv_bn_params(k1, cin, bott, 1)
            lp["conv2"] = _make_conv_bn_params(k2, bott, bott, 3)
            lp["conv3"] = _make_conv_bn_params(k3, bott, out_channels, 1)
        else:  # basic
            lp["conv1"] = _make_conv_bn_params(k1, cin, out_channels, 3)
            lp["conv2"] = _make_conv_bn_params(k2, out_channels, out_channels, 3)
        layers.append(lp)
    return {"layer_type": layer_type, "layers": layers}


def make_model_params(key, config):
    key, ke = jax.random.split(key)
    params = {"embedder": _make_conv_bn_params(
        ke, config["num_channels"], config["embedding_size"],
        config["embedding_kernel_size"])}

    stages = []
    key, ks = jax.random.split(key)
    stages.append(_make_stage_params(
        ks, config["embedding_size"], config["hidden_sizes"][0],
        depth=config["depths"][0],
        stride=2 if config["downsample_in_first_stage"] else 1,
        layer_type=config["layer_type"], reduction=config["reduction"]))
    for (cin, cout), depth in zip(zip(config["hidden_sizes"],
                                      config["hidden_sizes"][1:]),
                                  config["depths"][1:]):
        key, ks = jax.random.split(key)
        stages.append(_make_stage_params(
            ks, cin, cout, depth=depth,
            stride=1 if config["downsample_after_stage"] else 2,
            layer_type=config["layer_type"], reduction=config["reduction"]))
        if config["downsample_after_stage"]:
            key, kd = jax.random.split(key)
            stages.append({"layer_type": "downsample_conv",
                           "conv": _make_conv_bn_params(kd, cout, cout, 3)})
    params["stages"] = stages

    hidden = config["hidden_sizes"][-1]
    nl = config["num_labels"]
    key, kw, kb = jax.random.split(key, 3)
    lw = 0.1 * jax.random.normal(kw, (nl, hidden), jnp.float32)
    lb = 0.1 * jax.random.normal(kb, (nl,), jnp.float32)
    Kp, Np = _round_up(hidden, _LANE), _round_up(nl, _LANE)
    params["classifier"] = {
        "w": lw, "b": lb, "nl": nl, "hidden": hidden, "Kp": Kp, "Np": Np,
        "wmat": jnp.pad(lw.T, ((0, Kp - hidden), (0, Np - nl))).astype(jnp.bfloat16)[None],
        "scale": jnp.pad(jnp.ones((nl,), jnp.float32), (0, Np - nl)).reshape(1, Np),
        "shift": jnp.pad(lb, (0, Np - nl)).reshape(1, Np),
    }
    return params


# ------------------------------ model forward ------------------------------

def _bottleneck_layer(x, lp):
    s = lp["stride"]
    res = (_conv_bn(x, lp["residual"], stride=s, relu=False)
           if lp["residual"] is not None else x)
    h = _conv_bn(x, lp["conv1"], stride=1, relu=True)
    h = _conv_bn(h, lp["conv2"], stride=s, relu=True)
    # last conv of the block: BN (no act) + residual add + ReLU fused in-kernel
    return _conv_bn(h, lp["conv3"], stride=1, relu=False, residual=res)


def _basic_layer(x, lp):
    s = lp["stride"]
    res = (_conv_bn(x, lp["residual"], stride=s, relu=False)
           if lp["residual"] is not None else x)
    h = _conv_bn(x, lp["conv1"], stride=s, relu=True)
    return _conv_bn(h, lp["conv2"], stride=1, relu=False, residual=res)


def resnet_forward(pixel_values, params, config):
    """ResNetForImageClassification.forward: NCHW pixels -> (N, num_labels) logits."""
    x = jnp.transpose(pixel_values, (0, 2, 3, 1))  # NCHW -> NHWC (compute layout)
    x = _conv_bn(x, params["embedder"], stride=config["embedding_stride"], relu=True)
    if config["embedding_pooling_with_downsample"]:
        x = _maxpool_3x3_s2(x)
    for stage in params["stages"]:
        lt = stage["layer_type"]
        if lt == "downsample_conv":
            x = _conv_bn(x, stage["conv"], stride=2, relu=True)
            continue
        layer_fn = _bottleneck_layer if lt == "bottleneck" else _basic_layer
        for lp in stage["layers"]:
            x = layer_fn(x, lp)
    # AdaptiveAvgPool2d((1,1)) + flatten(1): tiny reduction, plain-JAX glue.
    pooled = jnp.mean(x, axis=(1, 2))
    return _linear(pooled, params["classifier"])


# ----------------------------- pure-JAX reference ---------------------------

def _qcast(x, quantize):
    return x.astype(jnp.bfloat16).astype(jnp.float32) if quantize else x


def _ref_conv_bn(x_nhwc, p, *, stride, relu, quantize):
    k = p["k"]
    pad = k // 2
    w_hwio = jnp.transpose(p["w"], (2, 3, 1, 0))
    y = jax.lax.conv_general_dilated(
        _qcast(x_nhwc, quantize), _qcast(w_hwio, quantize),
        window_strides=(stride, stride), padding=[(pad, pad), (pad, pad)],
        dimension_numbers=("NHWC", "HWIO", "NHWC"),
        precision=jax.lax.Precision.HIGHEST)
    y = (y - p["mean"]) / jnp.sqrt(p["var"] + _BN_EPS) * p["gamma"] + p["beta"]
    return jnp.maximum(y, 0.0) if relu else y


def _ref_layer(x, lp, layer_type, quantize):
    s = lp["stride"]
    res = (_ref_conv_bn(x, lp["residual"], stride=s, relu=False, quantize=quantize)
           if lp["residual"] is not None else x)
    if layer_type == "bottleneck":
        h = _ref_conv_bn(x, lp["conv1"], stride=1, relu=True, quantize=quantize)
        h = _ref_conv_bn(h, lp["conv2"], stride=s, relu=True, quantize=quantize)
        h = _ref_conv_bn(h, lp["conv3"], stride=1, relu=False, quantize=quantize)
    else:
        h = _ref_conv_bn(x, lp["conv1"], stride=s, relu=True, quantize=quantize)
        h = _ref_conv_bn(h, lp["conv2"], stride=1, relu=False, quantize=quantize)
    return jnp.maximum(res + h, 0.0)


def _ref_forward(pixel_values, params, config, *, quantize):
    x = jnp.transpose(pixel_values, (0, 2, 3, 1))
    x = _ref_conv_bn(x, params["embedder"], stride=config["embedding_stride"],
                     relu=True, quantize=quantize)
    if config["embedding_pooling_with_downsample"]:
        x = _maxpool_3x3_s2(x)
    for stage in params["stages"]:
        if stage["layer_type"] == "downsample_conv":
            x = _ref_conv_bn(x, stage["conv"], stride=2, relu=True, quantize=quantize)
            continue
        for lp in stage["layers"]:
            x = _ref_layer(x, lp, stage["layer_type"], quantize)
    pooled = jnp.mean(x, axis=(1, 2))
    cp = params["classifier"]
    return jnp.dot(_qcast(pooled, quantize), _qcast(cp["w"].T, quantize),
                   precision=jax.lax.Precision.HIGHEST) + cp["b"]


# ----------------------------------- main -----------------------------------

if __name__ == "__main__":
    root = jax.random.PRNGKey(0)
    kx, kp1, kp2 = jax.random.split(root, 3)

    # pixel_values: (batch=2, num_channels=4, 16, 16), NCHW like PyTorch.
    x = jax.random.normal(kx, (2, 4, 16, 16), jnp.float32)

    # Small config with config.layer_type == 'bottleneck'.
    cfg_bneck = dict(
        num_channels=4, embedding_size=16, embedding_kernel_size=3,
        embedding_stride=2, embedding_pooling_with_downsample=True,
        hidden_sizes=[32, 64], depths=[2, 1], layer_type="bottleneck",
        reduction=4, downsample_in_first_stage=False,
        downsample_after_stage=False, num_labels=10)
    params1 = make_model_params(kp1, cfg_bneck)
    logits = jax.block_until_ready(resnet_forward(x, params1, cfg_bneck))
    assert logits.shape == (2, 10), logits.shape

    # Tight check vs a reference that rounds matmul operands to bf16 the same
    # way the kernel does (isolates kernel math from the deliberate MXU cast).
    ref_q = _ref_forward(x, params1, cfg_bneck, quantize=True)
    assert jnp.allclose(logits, ref_q, rtol=1e-2, atol=1e-2), \
        float(jnp.max(jnp.abs(logits - ref_q)))
    # Loose check vs the full-f32 reference (bounds the bf16 MXU error).
    ref_f = _ref_forward(x, params1, cfg_bneck, quantize=False)
    assert jnp.allclose(logits, ref_f, rtol=1e-1, atol=1e-1), \
        float(jnp.max(jnp.abs(logits - ref_f)))

    # Also exercise the 'basic' layer type + downsample_after_stage path.
    cfg_basic = dict(
        num_channels=4, embedding_size=16, embedding_kernel_size=3,
        embedding_stride=2, embedding_pooling_with_downsample=True,
        hidden_sizes=[32, 32], depths=[1, 1], layer_type="basic",
        reduction=4, downsample_in_first_stage=False,
        downsample_after_stage=True, num_labels=10)
    params2 = make_model_params(kp2, cfg_basic)
    logits2 = jax.block_until_ready(resnet_forward(x, params2, cfg_basic))
    ref2 = _ref_forward(x, params2, cfg_basic, quantize=True)
    assert jnp.allclose(logits2, ref2, rtol=1e-2, atol=1e-2), \
        float(jnp.max(jnp.abs(logits2 - ref2)))

    print("KERNEL_OK")
</pallas_src>

<mosaic_0001>
module attributes {stable_mosaic.version = 11 : i64} {
  func.func @_matmul_bn_kernel(%arg0: i32, %arg1: i32, %arg2: i32, %arg3: i32, %arg4: memref<1x128x128xbf16, #tpu.memory_space<vmem>>, %arg5: memref<1x128x128xbf16, #tpu.memory_space<vmem>>, %arg6: memref<1x128xf32, #tpu.memory_space<vmem>>, %arg7: memref<1x128xf32, #tpu.memory_space<vmem>>, %arg8: memref<128x128xf32, #tpu.memory_space<vmem>>, %arg9: memref<128x128xf32, #tpu.memory_space<vmem>>) attributes {dimension_semantics = [#tpu.dimension_semantics<parallel>, #tpu.dimension_semantics<parallel>, #tpu.dimension_semantics<arbitrary>, #tpu.dimension_semantics<arbitrary>], iteration_bounds = array<i64: 1, 1, 9, 1>, scalar_prefetch = 0 : i64, scratch_operands = 1 : i64, tpu.core_type = #tpu.core_type<tc>, window_params = [{transform_indices = @transform_0, window_bounds = array<i64: 1, 128, 128>}, {transform_indices = @transform_1, window_bounds = array<i64: 1, 128, 128>}, {transform_indices = @transform_2, window_bounds = array<i64: 1, 128>}, {transform_indices = @transform_3, window_bounds = array<i64: 1, 128>}, {transform_indices = @transform_4, window_bounds = array<i64: 128, 128>}]} {
    %c0_i32 = arith.constant 0 : i32
    %0 = arith.cmpi eq, %arg2, %c0_i32 : i32
    %c0_i32_0 = arith.constant 0 : i32
    %1 = arith.cmpi eq, %arg3, %c0_i32_0 : i32
    %2 = arith.andi %0, %1 : i1
    %3 = arith.extui %2 : i1 to i32
    %c0_i32_1 = arith.constant 0 : i32
    %4 = arith.cmpi ne, %3, %c0_i32_1 : i32
    scf.if %4 {
      %cst_13 = arith.constant 0.000000e+00 : f32
      %18 = vector.broadcast %cst_13 : f32 to vector<128x128xf32>
      %c0_14 = arith.constant 0 : index
      %c0_15 = arith.constant 0 : index
      %19 = vector.load %arg9[%c0_14, %c0_15] : memref<128x128xf32, #tpu.memory_space<vmem>>, vector<128x128xf32>
      tpu.vector_store %arg9[%c0_14, %c0_15], %18 {strides = array<i32>} : memref<128x128xf32, #tpu.memory_space<vmem>>, vector<128x128xf32>,
    } else {
    }
    %c0 = arith.constant 0 : index
    %c0_2 = arith.constant 0 : index
    %5 = vector.load %arg9[%c0, %c0_2] : memref<128x128xf32, #tpu.memory_space<vmem>>, vector<128x128xf32>
    %c0_3 = arith.constant 0 : index
    %c0_4 = arith.constant 0 : index
    %c0_5 = arith.constant 0 : index
    %6 = vector.load %arg4[%c0_3, %c0_4, %c0_5] : memref<1x128x128xbf16, #tpu.memory_space<vmem>>, vector<1x128x128xbf16>
    %7 = vector.shape_cast %6 : vector<1x128x128xbf16> to vector<128x128xbf16>
    %c0_6 = arith.constant 0 : index
    %c0_7 = arith.constant 0 : index
    %c0_8 = arith.constant 0 : index
    %8 = vector.load %arg5[%c0_6, %c0_7, %c0_8] : memref<1x128x128xbf16, #tpu.memory_space<vmem>>, vector<1x128x128xbf16>
    %9 = vector.shape_cast %8 : vector<1x128x128xbf16> to vector<128x128xbf16>
    %cst = arith.constant dense<0.000000e+00> : vector<128x128xf32>
    %10 = tpu.matmul %7, %9, %cst {dimension_numbers = #tpu.dot_dimension_numbers<[1], [0], [0], [1], [0, 0, 1, 1], [], []>} : vector<128x128xbf16>, vector<128x128xbf16>, vector<128x128xf32> -> vector<128x128xf32>
    %11 = arith.addf %5, %10 : vector<128x128xf32>
    %c0_9 = arith.constant 0 : index
    %c0_10 = arith.constant 0 : index
    %12 = vector.load %arg9[%c0_9, %c0_10] : memref<128x128xf32, #tpu.memory_space<vmem>>, vector<128x128xf32>
    tpu.vector_store %arg9[%c0_9, %c0_10], %11 {strides = array<i32>} : memref<128x128xf32, #tpu.memory_space<vmem>>, vector<128x128xf32>,
    %c8_i32 = arith.constant 8 : i32
    %13 = arith.cmpi eq, %arg2, %c8_i32 : i32
    %c0_i32_11 = arith.constant 0 : i32
    %14 = arith.cmpi eq, %arg3, %c0_i32_11 : i32
    %15 = arith.andi %13, %14 : i1
    %16 = arith.extui %15 : i1 to i32
    %c0_i32_12 = arith.constant 0 : i32
    %17 = arith.cmpi ne, %16, %c0_i32_12 : i32
    scf.if %17 {
      %c0_13 = arith.constant 0 : index
      %c0_14 = arith.constant 0 : index
      %18 = vector.load %arg9[%c0_13, %c0_14] : memref<128x128xf32, #tpu.memory_space<vmem>>, vector<128x128xf32>
      %c0_15 = arith.constant 0 : index
      %c0_16 = arith.constant 0 : index
      %19 = vector.load %arg6[%c0_15, %c0_16] : memref<1x128xf32, #tpu.memory_space<vmem>>, vector<1x128xf32>
      %20 = vector.broadcast %19 : vector<1x128xf32> to vector<128x128xf32>
      %21 = arith.mulf %18, %20 : vector<128x128xf32>
      %c0_17 = arith.constant 0 : index
      %c0_18 = arith.constant 0 : index
      %22 = vector.load %arg7[%c0_17, %c0_18] : memref<1x128xf32, #tpu.memory_space<vmem>>, vector<1x128xf32>
      %23 = vector.broadcast %22 : vector<1x128xf32> to vector<128x128xf32>
      %24 = arith.addf %21, %23 : vector<128x128xf32>
      %cst_19 = arith.constant 0.000000e+00 : f32
      %25 = vector.broadcast %cst_19 : f32 to vector<128x128xf32>
      %26 = arith.maximumf %24, %25 : vector<128x128xf32>
      %c0_20 = arith.constant 0 : index
      %c0_21 = arith.constant 0 : index
      %27 = vector.load %arg8[%c0_20, %c0_21] : memref<128x128xf32, #tpu.memory_space<vmem>>, vector<128x128xf32>
      tpu.vector_store %arg8[%c0_20, %c0_21], %26 {strides = array<i32>} : memref<128x128xf32, #tpu.memory_space<vmem>>, vector<128x128xf32>,
    } else {
    }
    return
  }
  func.func @transform_0(%arg0: i32, %arg1: i32, %arg2: i32, %arg3: i32) -> (i32, i32, i32) {
    %c0_i32 = arith.constant 0 : i32
    return %arg2, %arg0, %arg3 : i32, i32, i32
  }
  func.func @transform_1(%arg0: i32, %arg1: i32, %arg2: i32, %arg3: i32) -> (i32, i32, i32) {
    %c0_i32 = arith.constant 0 : i32
    return %arg2, %arg3, %arg1 : i32, i32, i32
  }
  func.func @transform_2(%arg0: i32, %arg1: i32, %arg2: i32, %arg3: i32) -> (i32, i32) {
    %c0_i32 = arith.constant 0 : i32
    %c0_i32_0 = arith.constant 0 : i32
    return %c0_i32, %arg1 : i32, i32
  }
  func.func @transform_3(%arg0: i32, %arg1: i32, %arg2: i32, %arg3: i32) -> (i32, i32) {
    %c0_i32 = arith.constant 0 : i32
    %c0_i32_0 = arith.constant 0 : i32
    return %c0_i32, %arg1 : i32, i32
  }
  func.func @transform_4(%arg0: i32, %arg1: i32, %arg2: i32, %arg3: i32) -> (i32, i32) {
    %c0_i32 = arith.constant 0 : i32
    return %arg0, %arg1 : i32, i32
  }
}

</mosaic_0001>

<llo_original>
// kernel: tpu_custom_call.1
$region0: #{tpu_custom_call.1}
  #allocation0 [shape = 'u32[]', space=smem, size = 0x4, offset = 0x4, fixed_abs, tag = 'smem constant byte address 0x4 - core index']
  #allocation1 [shape = 'u32[144,128]{1,0:T(1,128)}', space=vmem, size = 0x12000, scoped, tag = 'internal scratch']
  #allocation2 [shape = 'f32[128,128]{1,0:T(8,128)}', space=vmem, size = 0x10000, scoped, tag = 'scratch operand']
  %s0 = inlined_call_operand.hbm [shape: bf16[9,128,128], index: 0, kind: input, shape index: {}]
  %s1 = inlined_call_operand.hbm [shape: bf16[9,128,128], index: 1, kind: input, shape index: {}]
  %s2 = inlined_call_operand.vmem [shape: f32[1,128], index: 2, kind: input, shape index: {}]
  %s3 = inlined_call_operand.vmem [shape: f32[1,128], index: 3, kind: input, shape index: {}]
  %s4 = inlined_call_operand.hbm [shape: f32[128,128], index: 4, kind: output, shape index: {}]
  %s5 = sld [smem:[#allocation0]]
  $region65: #{tpu_custom_call.1} parent=0
    _
  %s7 = ssub.s32 1, %s5
  %s8 = scalar_select 0, %s7, %s5
  $region1: #{tpu_custom_call.1} parent=0
    #allocation3 [shape = 'u8[65536]{0}', space=vmem, size = 0x10000, scoped, tag = 'input window, operand 0']
    #allocation4 [shape = 's32[2]{0}', space=sflag, size = 0x8, scoped, tag = 'scoped memory for tpu_custom_call.1']
    #allocation5 [shape = 's32[2]{0}', space=sflag, size = 0x8, scoped, tag = 'scoped memory for tpu_custom_call.1']
    #allocation6 [shape = 'u8[65536]{0}', space=vmem, size = 0x10000, scoped, tag = 'input window, operand 1']
    #allocation7 [shape = 's32[2]{0}', space=sflag, size = 0x8, scoped, tag = 'scoped memory for tpu_custom_call.1']
    #allocation8 [shape = 'u8[65536]{0}', space=vmem, size = 0x10000, scoped, tag = 'output window, operand 0, single buffered']
    %9 = vsyncpa [#allocation4], 0
    %s10 = scalar_lea.sflag [#allocation4], 1
    %11 = vsyncpa %s10, 0
    %12 = vsyncpa [#allocation7], 0
    %s13 = scalar_lea.sflag [#allocation7], 1
    %14 = vsyncpa %s13, 0
    %15 = vsyncpa [#allocation5], 0
    loop: start=0, step=1, limit=11
    $region2: #{tpu_custom_call.1} parent=1 // loop_pre_header
      _
    $region3: #{tpu_custom_call.1} parent=1 // loop_header
      %s17 = sphi 0, %s21
      %p18 = scmp.ge.s32.totalorder %s17, 11
      %s24 = sphi 0, %s50
      %s25 = sphi 0, %s46
      %s26 = sphi 0, %s42
      %s27 = sphi 0, %s38
      %s28 = sphi 0, %s24
      %s29 = sphi 0, %s25
      %s30 = sphi 0, %s26
      %s31 = sphi 0, %s27
      %s32 = sphi 0, %s28
      %s33 = sphi 0, %s29
      %s34 = sphi 0, %s30
      %s35 = sphi 0, %s31
      %s57 = sphi 0, %s59
      %s60 = sphi 0, %s57
      %s61 = sphi 0, %s60
      %s77 = sphi 0, %s61
      %s87 = sphi 0, %s89
      %s90 = sphi 0, %s87
      %s91 = sphi 0, %s90
      %s107 = sphi 0, %s91
      %s113 = sphi 0, %s115
      %s116 = sphi 0, %s113
      %s117 = sphi 0, %s116
      %s133 = sphi 0, %s117
      %s139 = sphi 0, %s141
      %s142 = sphi 0, %s139
      %s143 = sphi 0, %s142
      %s159 = sphi 0, %s143
      %s167 = sphi 0, %s169
      %s170 = sphi 0, %s167
      %s171 = sphi 0, %s170
      %s187 = sphi 0, %s171
    $region4: #{tpu_custom_call.1} parent=1 // loop_header_branch
      %20 = sbr.rel (%p18) target = $region8
    $region5: #{tpu_custom_call.1} parent=1 // loop_body
      %s22 = ssub.s32 %s17, 1
      %s23 = ssub.s32 %s17, 2
      %s36 = sadd.s32 1, %s27
      %p37 = scmp.ge.s32.totalorder %s36, 1
      %s38 = scalar_select %p37, 0, %s36
      %s39 = sadd.s32 1, %s26
      %s40 = scalar_select %p37, %s39, %s26
      %p41 = scmp.ge.s32.totalorder %s40, 9
      %s42 = scalar_select %p41, 0, %s40
      %s43 = sadd.s32 1, %s25
      %s44 = scalar_select %p41, %s43, %s25
      %p45 = scmp.ge.s32.totalorder %s44, 1
      %s46 = scalar_select %p45, 0, %s44
      %s47 = sadd.s32 1, %s24
      %s48 = scalar_select %p45, %s47, %s24
      %p49 = scmp.ge.s32.totalorder %s48, 1
      %s50 = scalar_select %p49, 0, %s48
      %s51 = ssub.s32 %s26, %s42
      %s52 = ssub.s32 %s24, %s50
      %s53 = sor.u32 %s51, %s52
      %s54 = ssub.s32 %s27, %s38
      %s55 = sor.u32 %s53, %s54
      %p56 = scmp.eq.s32.totalorder %s55, 0
      %s58 = sadd.s32 %s57, 1
      %s59 = scalar_select %p56, %s57, %s58
      %p62 = pneg %p56
      %p63 = scmp.eq.s32.totalorder %s17, 8
      %p64 = por %p62, %p63
      %p65 = scmp.ne.s32.totalorder %s57, %s60
      %p66 = scmp.eq.s32.totalorder %s17, 0
      %p67 = por %p65, %p66
      %p68 = scmp.ne.s32.totalorder %s57, %s60
      %p69 = scmp.eq.s32.totalorder %s22, 8
      %p70 = por %p68, %p69
      %p71 = scmp.ne.s32.totalorder %s60, %s61
      %p72 = scmp.eq.s32.totalorder %s22, 0
      %p73 = por %p71, %p72
      %p74 = scmp.ne.s32.totalorder %s60, %s61
      %p75 = scmp.eq.s32.totalorder %s23, 8
      %p76 = por %p74, %p75
      %p78 = scmp.ne.s32.totalorder %s61, %s77
      %p79 = scmp.eq.s32.totalorder %s23, 0
      %p80 = por %p78, %p79
      %s81 = ssub.s32 %s26, %s42
      %s82 = ssub.s32 %s27, %s38
      %s83 = sor.u32 %s81, %s82
      %s84 = ssub.s32 %s25, %s46
      %s85 = sor.u32 %s83, %s84
      %p86 = scmp.eq.s32.totalorder %s85, 0
      %s88 = sadd.s32 %s87, 1
      %s89 = scalar_select %p86, %s87, %s88
      %p92 = pneg %p86
      %p93 = scmp.eq.s32.totalorder %s17, 8
      %p94 = por %p92, %p93
      %p95 = scmp.ne.s32.totalorder %s87, %s90
      %p96 = scmp.eq.s32.totalorder %s17, 0
      %p97 = por %p95, %p96
      %p98 = scmp.ne.s32.totalorder %s87, %s90
      %p99 = scmp.eq.s32.totalorder %s22, 8
      %p100 = por %p98, %p99
      %p101 = scmp.ne.s32.totalorder %s90, %s91
      %p102 = scmp.eq.s32.totalorder %s22, 0
      %p103 = por %p101, %p102
      %p104 = scmp.ne.s32.totalorder %s90, %s91
      %p105 = scmp.eq.s32.totalorder %s23, 8
      %p106 = por %p104, %p105
      %p108 = scmp.ne.s32.totalorder %s91, %s107
      %p109 = scmp.eq.s32.totalorder %s23, 0
      %p110 = por %p108, %p109
      %s111 = ssub.s32 %s25, %s46
      %p112 = scmp.eq.s32.totalorder %s111, 0
      %s114 = sadd.s32 %s113, 1
      %s115 = scalar_select %p112, %s113, %s114
      %p118 = pneg %p112
      %p119 = scmp.eq.s32.totalorder %s17, 8
      %p120 = por %p118, %p119
      %p121 = scmp.ne.s32.totalorder %s113, %s116
      %p122 = scmp.eq.s32.totalorder %s17, 0
      %p123 = por %p121, %p122
      %p124 = scmp.ne.s32.totalorder %s113, %s116
      %p125 = scmp.eq.s32.totalorder %s22, 8
      %p126 = por %p124, %p125
      %p127 = scmp.ne.s32.totalorder %s116, %s117
      %p128 = scmp.eq.s32.totalorder %s22, 0
      %p129 = por %p127, %p128
      %p130 = scmp.ne.s32.totalorder %s116, %s117
      %p131 = scmp.eq.s32.totalorder %s23, 8
      %p132 = por %p130, %p131
      %p134 = scmp.ne.s32.totalorder %s117, %s133
      %p135 = scmp.eq.s32.totalorder %s23, 0
      %p136 = por %p134, %p135
      %s137 = ssub.s32 %s25, %s46
      %p138 = scmp.eq.s32.totalorder %s137, 0
      %s140 = sadd.s32 %s139, 1
      %s141 = scalar_select %p138, %s139, %s140
      %p144 = pneg %p138
      %p145 = scmp.eq.s32.totalorder %s17, 8
      %p146 = por %p144, %p145
      %p147 = scmp.ne.s32.totalorder %s139, %s142
      %p148 = scmp.eq.s32.totalorder %s17, 0
      %p149 = por %p147, %p148
      %p150 = scmp.ne.s32.totalorder %s139, %s142
      %p151 = scmp.eq.s32.totalorder %s22, 8
      %p152 = por %p150, %p151
      %p153 = scmp.ne.s32.totalorder %s142, %s143
      %p154 = scmp.eq.s32.totalorder %s22, 0
      %p155 = por %p153, %p154
      %p156 = scmp.ne.s32.totalorder %s142, %s143
      %p157 = scmp.eq.s32.totalorder %s23, 8
      %p158 = por %p156, %p157
      %p160 = scmp.ne.s32.totalorder %s143, %s159
      %p161 = scmp.eq.s32.totalorder %s23, 0
      %p162 = por %p160, %p161
      %s163 = ssub.s32 %s24, %s50
      %s164 = ssub.s32 %s25, %s46
      %s165 = sor.u32 %s163, %s164
      %p166 = scmp.eq.s32.totalorder %s165, 0
      %s168 = sadd.s32 %s167, 1
      %s169 = scalar_select %p166, %s167, %s168
      %p172 = pneg %p166
      %p173 = scmp.eq.s32.totalorder %s17, 8
      %p174 = por %p172, %p173
      %p175 = scmp.ne.s32.totalorder %s167, %s170
      %p176 = scmp.eq.s32.totalorder %s17, 0
      %p177 = por %p175, %p176
      %p178 = scmp.ne.s32.totalorder %s167, %s170
      %p179 = scmp.eq.s32.totalorder %s22, 8
      %p180 = por %p178, %p179
      %p181 = scmp.ne.s32.totalorder %s170, %s171
      %p182 = scmp.eq.s32.totalorder %s22, 0
      %p183 = por %p181, %p182
      %p184 = scmp.ne.s32.totalorder %s170, %s171
      %p185 = scmp.eq.s32.totalorder %s23, 8
      %p186 = por %p184, %p185
      %p188 = scmp.ne.s32.totalorder %s171, %s187
      %p189 = scmp.eq.s32.totalorder %s23, 0
      %p190 = por %p188, %p189
      %p191 = scmp.le.s32.totalorder 1, %s17
      %p192 = scmp.lt.s32.totalorder %s17, 10
      %p193 = pnand %p191, %p192
      %p194 = pneg %p193
      // Predicated region
      $region9: #{tpu_custom_call.1} parent=5 // pred_check
        _
      $region10: #{tpu_custom_call.1} parent=5 // pred_check_branch
        %196 = sbr.rel (%p193) target = $region12
      $region11: #{tpu_custom_call.1} parent=5 // pred_region
        %s197 = ssub.s32 %s17, 1
        // Predicated region
        $region13: #{tpu_custom_call.1} parent=11 // pred_check
          %p198 = pneg %p129
        $region14: #{tpu_custom_call.1} parent=11 // pred_check_branch
          %200 = sbr.rel (%p198) target = $region16
        $region15: #{tpu_custom_call.1} parent=11 // pred_region
          %p201 = scmp.lt.s32.totalorder %s29, 0
          %s202 = scalar_select %p201, %s29, 0
          %s203 = scalar_lea.vmem %s2, %s202
        $region16: #{tpu_custom_call.1} parent=11 // pred_fallthru
          _
        // Predicated region
        $region17: #{tpu_custom_call.1} parent=11 // pred_check
          %p204 = pneg %p155
        $region18: #{tpu_custom_call.1} parent=11 // pred_check_branch
          %206 = sbr.rel (%p204) target = $region20
        $region19: #{tpu_custom_call.1} parent=11 // pred_region
          %p207 = scmp.lt.s32.totalorder %s29, 0
          %s208 = scalar_select %p207, %s29, 0
          %s209 = scalar_lea.vmem %s3, %s208
        $region20: #{tpu_custom_call.1} parent=11 // pred_fallthru
          _
      $region12: #{tpu_custom_call.1} parent=5 // pred_fallthru
        _
      %p210 = scmp.lt.s32.totalorder %s17, 9
      // Predicated region
      $region21: #{tpu_custom_call.1} parent=5 // pred_check
        %p211 = pneg %p210
      $region22: #{tpu_custom_call.1} parent=5 // pred_check_branch
        %213 = sbr.rel (%p211) target = $region24
      $region23: #{tpu_custom_call.1} parent=5 // pred_region
        // Predicated region
        $region25: #{tpu_custom_call.1} parent=23 // pred_check
          %p214 = pneg %p67
        $region26: #{tpu_custom_call.1} parent=23 // pred_check_branch
          %216 = sbr.rel (%p214) target = $region28
        $region27: #{tpu_custom_call.1} parent=23 // pred_region
          %s217 = sand.u32 %s57, 1
          %s218 = scalar_lea.sflag [#allocation4], %s217
          %s219 = sand.u32 %s57, 1
          %s220 = smul.addr %s219, 64
          %s221 = scalar_lea.vmem [#allocation3], %s220
          %s222 = smul.u32 16, %s24
          %s224 = ssub.s32 1024, 1024
          %225 = vsyncadd %s218, %s224
          %s226 = sadd.s32 %s27, %s222
          %s227 = smul.addr %s26, 16
          %s228 = sadd.s32 %s226, %s227
          %s229 = smul.addr %s228, 64
          %s230 = scalar_lea.hbm %s0, %s229
          %s231 = sshll.u32 %s221, 4
          %s232 = int_to_ptr.vmem [resolvable:$true] %s231
          %237 = dma.hbm_to_vmem [thread:$0]  %s230, 1024, %s232, %s218, 64, 64, 4
        $region28: #{tpu_custom_call.1} parent=23 // pred_fallthru
          _
        // Predicated region
        $region29: #{tpu_custom_call.1} parent=23 // pred_check
          %p238 = pneg %p97
        $region30: #{tpu_custom_call.1} parent=23 // pred_check_branch
          %240 = sbr.rel (%p238) target = $region32
        $region31: #{tpu_custom_call.1} parent=23 // pred_region
          %s241 = sand.u32 %s87, 1
          %s242 = scalar_lea.sflag [#allocation7], %s241
          %s243 = sand.u32 %s87, 1
          %s244 = smul.addr %s243, 64
          %s245 = scalar_lea.vmem [#allocation6], %s244
          %s246 = smul.u32 16, %s27
          %s248 = ssub.s32 1024, 1024
          %249 = vsyncadd %s242, %s248
          %s250 = sadd.s32 %s25, %s246
          %s251 = smul.addr %s26, 16
          %s252 = sadd.s32 %s250, %s251
          %s253 = smul.addr %s252, 64
          %s254 = scalar_lea.hbm %s1, %s253
          %s255 = sshll.u32 %s245, 4
          %s256 = int_to_ptr.vmem [resolvable:$true] %s255
          %261 = dma.hbm_to_vmem [thread:$0]  %s254, 1024, %s256, %s242, 64, 64, 4
        $region32: #{tpu_custom_call.1} parent=23 // pred_fallthru
          _
      $region24: #{tpu_custom_call.1} parent=5 // pred_fallthru
        _
      %p262 = scmp.le.s32.totalorder 1, %s17
      %p263 = scmp.lt.s32.totalorder %s17, 10
      %p264 = pnand %p262, %p263
      %p265 = pneg %p264
      // Predicated region
      $region33: #{tpu_custom_call.1} parent=5 // pred_check
        _
      $region34: #{tpu_custom_call.1} parent=5 // pred_check_branch
        %267 = sbr.rel (%p264) target = $region36
      $region35: #{tpu_custom_call.1} parent=5 // pred_region
        %s268 = ssub.s32 %s17, 1
        %s269 = sand.u32 %s60, 1
        %s270 = scalar_lea.sflag [#allocation4], %s269
        %s271 = sand.u32 %s60, 1
        %s272 = smul.addr %s271, 64
        %s273 = scalar_lea.vmem [#allocation3], %s272
        // Predicated region
        $region37: #{tpu_custom_call.1} parent=35 // pred_check
          %p274 = pneg %p73
        $region38: #{tpu_custom_call.1} parent=35 // pred_check_branch
          %276 = sbr.rel (%p274) target = $region40
        $region39: #{tpu_custom_call.1} parent=35 // pred_region
          %277 = dma.done %s270, 1024
        $region40: #{tpu_custom_call.1} parent=35 // pred_fallthru
          _
        %s278 = sand.u32 %s90, 1
        %s279 = scalar_lea.sflag [#allocation7], %s278
        %s280 = sand.u32 %s90, 1
        %s281 = smul.addr %s280, 64
        %s282 = scalar_lea.vmem [#allocation6], %s281
        // Predicated region
        $region41: #{tpu_custom_call.1} parent=35 // pred_check
          %p283 = pneg %p103
        $region42: #{tpu_custom_call.1} parent=35 // pred_check_branch
          %285 = sbr.rel (%p283) target = $region44
        $region43: #{tpu_custom_call.1} parent=35 // pred_region
          %286 = dma.done %s279, 1024
        $region44: #{tpu_custom_call.1} parent=35 // pred_fallthru
          _
        %s287 = sand.u32 %s60, 1
        %s288 = scalar_lea.sflag [#allocation4], %s287
        %s289 = sand.u32 %s60, 1
        %s290 = smul.addr %s289, 64
        %s291 = scalar_lea.vmem [#allocation3], %s290
        %p292 = pneg %p73
        %p293 = pneg %p70
        %s294 = sand.u32 %s90, 1
        %s295 = scalar_lea.sflag [#allocation7], %s294
        %s296 = sand.u32 %s90, 1
        %s297 = smul.addr %s296, 64
        %s298 = scalar_lea.vmem [#allocation6], %s297
        %p299 = pneg %p103
        %p300 = pneg %p100
        %p301 = scmp.lt.s32.totalorder %s29, 0
        %s302 = scalar_select %p301, %s29, 0
        %s303 = scalar_lea.vmem %s2, %s302
        %p304 = pneg %p129
        %p305 = pneg %p126
        %p306 = scmp.lt.s32.totalorder %s29, 0
        %s307 = scalar_select %p306, %s29, 0
        %s308 = scalar_lea.vmem %s3, %s307
        %p309 = pneg %p155
        %p310 = pneg %p152
        %p311 = pneg %p183
        %p312 = pneg %p180
        %s313 = smul.u32 16, %s28
        %s314 = smul.u32 16, %s31
        %p315 = scmp.lt.s32.totalorder %s29, 0
        %s316 = scalar_select %p315, %s29, 0
        %s317 = scalar_lea.vmem %s2, %s316
        %p318 = scmp.lt.s32.totalorder %s29, 0
        %s319 = scalar_select %p318, %s29, 0
        %s320 = scalar_lea.vmem %s3, %s319
        %s321 = smul.u32 16, %s28
        %p323 = scmp.eq.s32.totalorder %s30, 0
        %p324 = scmp.eq.s32.totalorder %s31, 0
        %p325 = pnand %p323, %p324
        %p326 = pneg %p325
        // Predicated region
        $region45: #{tpu_custom_call.1} parent=35 // pred_check
          _
        $region46: #{tpu_custom_call.1} parent=35 // pred_check_branch
          %328 = sbr.rel (%p325) target = $region48
        $region47: #{tpu_custom_call.1} parent=35 // pred_region
          %329 = vst [vmem:[#allocation2] sm:$0xff] 0.0
          %330 = vst [vmem:[#allocation2 + $0x8] sm:$0xff] 0.0
          %331 = vst [vmem:[#allocation2 + $0x10] sm:$0xff] 0.0
          %332 = vst [vmem:[#allocation2 + $0x18] sm:$0xff] 0.0
          %333 = vst [vmem:[#allocation2 + $0x20] sm:$0xff] 0.0
          %334 = vst [vmem:[#allocation2 + $0x28] sm:$0xff] 0.0
          %335 = vst [vmem:[#allocation2 + $0x30] sm:$0xff] 0.0
          %336 = vst [vmem:[#allocation2 + $0x38] sm:$0xff] 0.0
          %337 = vst [vmem:[#allocation2 + $0x40] sm:$0xff] 0.0
          %338 = vst [vmem:[#allocation2 + $0x48] sm:$0xff] 0.0
          %339 = vst [vmem:[#allocation2 + $0x50] sm:$0xff] 0.0
          %340 = vst [vmem:[#allocation2 + $0x58] sm:$0xff] 0.0
          %341 = vst [vmem:[#allocation2 + $0x60] sm:$0xff] 0.0
          %342 = vst [vmem:[#allocation2 + $0x68] sm:$0xff] 0.0
          %343 = vst [vmem:[#allocation2 + $0x70] sm:$0xff] 0.0
          %344 = vst [vmem:[#allocation2 + $0x78] sm:$0xff] 0.0
        $region48: #{tpu_custom_call.1} parent=35 // pred_fallthru
          _
        %v345 = vld [vmem:[#allocation2] sm:$0xff]
        %v346 = vld [vmem:[#allocation2 + $0x8] sm:$0xff]
        %v347 = vld [vmem:[#allocation2 + $0x10] sm:$0xff]
        %v348 = vld [vmem:[#allocation2 + $0x18] sm:$0xff]
        %v349 = vld [vmem:[#allocation2 + $0x20] sm:$0xff]
        %v350 = vld [vmem:[#allocation2 + $0x28] sm:$0xff]
        %v351 = vld [vmem:[#allocation2 + $0x30] sm:$0xff]
        %v352 = vld [vmem:[#allocation2 + $0x38] sm:$0xff]
        %v353 = vld [vmem:[#allocation2 + $0x40] sm:$0xff]
        %v354 = vld [vmem:[#allocation2 + $0x48] sm:$0xff]
        %v355 = vld [vmem:[#allocation2 + $0x50] sm:$0xff]
        %v356 = vld [vmem:[#allocation2 + $0x58] sm:$0xff]
        %v357 = vld [vmem:[#allocation2 + $0x60] sm:$0xff]
        %v358 = vld [vmem:[#allocation2 + $0x68] sm:$0xff]
        %v359 = vld [vmem:[#allocation2 + $0x70] sm:$0xff]
        %v360 = vld [vmem:[#allocation2 + $0x78] sm:$0xff]
        %v361 = vld [vmem:[%s273] sm:$0xf]
        %v362 = vld [vmem:[%s273 + $0x4] sm:$0xf]
        %v363 = vld [vmem:[%s273 + $0x8] sm:$0xf]
        %v364 = vld [vmem:[%s273 + $0xc] sm:$0xf]
        %v365 = vld [vmem:[%s273 + $0x10] sm:$0xf]
        %v366 = vld [vmem:[%s273 + $0x14] sm:$0xf]
        %v367 = vld [vmem:[%s273 + $0x18] sm:$0xf]
        %v368 = vld [vmem:[%s273 + $0x1c] sm:$0xf]
        %v369 = vld [vmem:[%s273 + $0x20] sm:$0xf]
        %v370 = vld [vmem:[%s273 + $0x24] sm:$0xf]
        %v371 = vld [vmem:[%s273 + $0x28] sm:$0xf]
        %v372 = vld [vmem:[%s273 + $0x2c] sm:$0xf]
        %v373 = vld [vmem:[%s273 + $0x30] sm:$0xf]
        %v374 = vld [vmem:[%s273 + $0x34] sm:$0xf]
        %v375 = vld [vmem:[%s273 + $0x38] sm:$0xf]
        %v376 = vld [vmem:[%s273 + $0x3c] sm:$0xf]
        %v377 = vld [vmem:[%s282] sm:$0xf]
        %v378 = vld [vmem:[%s282 + $0x4] sm:$0xf]
        %v379 = vld [vmem:[%s282 + $0x8] sm:$0xf]
        %v380 = vld [vmem:[%s282 + $0xc] sm:$0xf]
        %v381 = vld [vmem:[%s282 + $0x10] sm:$0xf]
        %v382 = vld [vmem:[%s282 + $0x14] sm:$0xf]
        %v383 = vld [vmem:[%s282 + $0x18] sm:$0xf]
        %v384 = vld [vmem:[%s282 + $0x1c] sm:$0xf]
        %v385 = vld [vmem:[%s282 + $0x20] sm:$0xf]
        %v386 = vld [vmem:[%s282 + $0x24] sm:$0xf]
        %v387 = vld [vmem:[%s282 + $0x28] sm:$0xf]
        %v388 = vld [vmem:[%s282 + $0x2c] sm:$0xf]
        %v389 = vld [vmem:[%s282 + $0x30] sm:$0xf]
        %v390 = vld [vmem:[%s282 + $0x34] sm:$0xf]
        %v391 = vld [vmem:[%s282 + $0x38] sm:$0xf]
        %v392 = vld [vmem:[%s282 + $0x3c] sm:$0xf]
        %v409 = vunpack.c.l.b16 %v361
        %v410 = vunpack.c.l.b16 %v362
        %v411 = vunpack.c.l.b16 %v363
        %v412 = vunpack.c.l.b16 %v364
        %v413 = vunpack.c.l.b16 %v365
        %v414 = vunpack.c.l.b16 %v366
        %v415 = vunpack.c.l.b16 %v367
        %v416 = vunpack.c.l.b16 %v368
        %v417 = vunpack.c.l.b16 %v369
        %v418 = vunpack.c.l.b16 %v370
        %v419 = vunpack.c.l.b16 %v371
        %v420 = vunpack.c.l.b16 %v372
        %v421 = vunpack.c.l.b16 %v373
        %v422 = vunpack.c.l.b16 %v374
        %v423 = vunpack.c.l.b16 %v375
        %v424 = vunpack.c.l.b16 %v376
        %v425 = vpack.c.b16 %v410, %v409
        %v426 = vpack.c.b16 %v412, %v411
        %v427 = vpack.c.b16 %v414, %v413
        %v428 = vpack.c.b16 %v416, %v415
        %v429 = vpack.c.b16 %v418, %v417
        %v430 = vpack.c.b16 %v420, %v419
        %v431 = vpack.c.b16 %v422, %v421
        %v432 = vpack.c.b16 %v424, %v423
        %v457 = vunpack.c.l.b16 %v377
        %v458 = vunpack.c.l.b16 %v378
        %v459 = vunpack.c.l.b16 %v379
        %v460 = vunpack.c.l.b16 %v380
        %v461 = vunpack.c.l.b16 %v381
        %v462 = vunpack.c.l.b16 %v382
        %v463 = vunpack.c.l.b16 %v383
        %v464 = vunpack.c.l.b16 %v384
        %v465 = vunpack.c.l.b16 %v385
        %v466 = vunpack.c.l.b16 %v386
        %v467 = vunpack.c.l.b16 %v387
        %v468 = vunpack.c.l.b16 %v388
        %v469 = vunpack.c.l.b16 %v389
        %v470 = vunpack.c.l.b16 %v390
        %v471 = vunpack.c.l.b16 %v391
        %v472 = vunpack.c.l.b16 %v392
        %v473 = vpack.c.b16 %v458, %v457
        %v474 = vpack.c.b16 %v460, %v459
        %v475 = vpack.c.b16 %v462, %v461
        %v476 = vpack.c.b16 %v464, %v463
        %v477 = vpack.c.b16 %v466, %v465
        %v478 = vpack.c.b16 %v468, %v467
        %v479 = vpack.c.b16 %v470, %v469
        %v480 = vpack.c.b16 %v472, %v471
        %489 = vmatprep.subr.bf16.mxu0 0
        %490 = vmatpush1.bf16.msra.mxu0 %v473
        %491 = vmatprep.subr.bf16.mxu0 0
        %492 = vmatpush1.bf16.msra.mxu0 %v474
        %493 = vmatprep.subr.bf16.mxu0 0
        %494 = vmatpush1.bf16.msra.mxu0 %v475
        %495 = vmatprep.subr.bf16.mxu0 0
        %496 = vmatpush1.bf16.msra.mxu0 %v476
        %497 = vmatprep.subr.bf16.mxu0 0
        %498 = vmatpush1.bf16.msra.mxu0 %v477
        %499 = vmatprep.subr.bf16.mxu0 0
        %500 = vmatpush1.bf16.msra.mxu0 %v478
        %501 = vmatprep.subr.bf16.mxu0 0
        %502 = vmatpush1.bf16.msra.mxu0 %v479
        %503 = vmatprep.subr.bf16.mxu0 0
        %504 = vmatpush1.bf16.msra.mxu0 %v480
        %505 = vmatprep.subr.bf16.mxu0 0
        %506 = vmatpush1.bf16.msra.mxu0 0
        %507 = vmatprep.subr.bf16.mxu0 0
        %508 = vmatpush1.bf16.msra.mxu0 0
        %509 = vmatprep.subr.bf16.mxu0 0
        %510 = vmatpush1.bf16.msra.mxu0 0
        %511 = vmatprep.subr.bf16.mxu0 0
        %512 = vmatpush1.bf16.msra.mxu0 0
        %513 = vmatprep.subr.bf16.mxu0 0
        %514 = vmatpush1.bf16.msra.mxu0 0
        %515 = vmatprep.subr.bf16.mxu0 0
        %516 = vmatpush1.bf16.msra.mxu0 0
        %517 = vmatprep.subr.bf16.mxu0 0
        %518 = vmatpush1.bf16.msra.mxu0 0
        %519 = vmatprep.subr.bf16.mxu0 0
        %520 = vmatpush1.bf16.msra.mxu0 0
        %521 = vmatprep.mubr.bf16.mxu0 0
        %522 = vmatmul.mubr.bf16.gmra.mrb[0].mxu0 %v425
        %v523 = vpop.f32.mrb[0].mxu0
        %v524 = vadd.f32 0.0, %v523
        %v525 = vpop.f32.mrb[0].mxu0
        %v526 = vpop.f32.mrb[0].mxu0
        %v527 = vadd.f32 0.0, %v526
        %v528 = vpop.f32.mrb[0].mxu0
        %529 = vmatprep.mubr.bf16.mxu0 0
        %530 = vmatmul.mubr.bf16.gmra.mrb[0].mxu0 %v426
        %v531 = vpop.f32.mrb[0].mxu0
        %v532 = vadd.f32 0.0, %v531
        %v533 = vpop.f32.mrb[0].mxu0
        %v534 = vpop.f32.mrb[0].mxu0
        %v535 = vadd.f32 0.0, %v534
        %v536 = vpop.f32.mrb[0].mxu0
        %537 = vmatprep.mubr.bf16.mxu0 0
        %538 = vmatmul.mubr.bf16.gmra.mrb[0].mxu0 %v427
        %v539 = vpop.f32.mrb[0].mxu0
        %v540 = vadd.f32 0.0, %v539
        %v541 = vpop.f32.mrb[0].mxu0
        %v542 = vpop.f32.mrb[0].mxu0
        %v543 = vadd.f32 0.0, %v542
        %v544 = vpop.f32.mrb[0].mxu0
        %545 = vmatprep.mubr.bf16.mxu0 0
        %546 = vmatmul.mubr.bf16.gmra.mrb[0].mxu0 %v428
        %v547 = vpop.f32.mrb[0].mxu0
        %v548 = vadd.f32 0.0, %v547
        %v549 = vpop.f32.mrb[0].mxu0
        %v550 = vpop.f32.mrb[0].mxu0
        %v551 = vadd.f32 0.0, %v550
        %v552 = vpop.f32.mrb[0].mxu0
        %553 = vmatprep.mubr.bf16.mxu0 0
        %554 = vmatmul.mubr.bf16.gmra.mrb[0].mxu0 %v429
        %v555 = vpop.f32.mrb[0].mxu0
        %v556 = vadd.f32 0.0, %v555
        %v557 = vpop.f32.mrb[0].mxu0
        %v558 = vpop.f32.mrb[0].mxu0
        %v559 = vadd.f32 0.0, %v558
        %v560 = vpop.f32.mrb[0].mxu0
        %561 = vmatprep.mubr.bf16.mxu0 0
        %562 = vmatmul.mubr.bf16.gmra.mrb[0].mxu0 %v430
        %v563 = vpop.f32.mrb[0].mxu0
        %v564 = vadd.f32 0.0, %v563
        %v565 = vpop.f32.mrb[0].mxu0
        %v566 = vpop.f32.mrb[0].mxu0
        %v567 = vadd.f32 0.0, %v566
        %v568 = vpop.f32.mrb[0].mxu0
        %569 = vmatprep.mubr.bf16.mxu0 0
        %570 = vmatmul.mubr.bf16.gmra.mrb[0].mxu0 %v431
        %v571 = vpop.f32.mrb[0].mxu0
        %v572 = vadd.f32 0.0, %v571
        %v573 = vpop.f32.mrb[0].mxu0
        %v574 = vpop.f32.mrb[0].mxu0
        %v575 = vadd.f32 0.0, %v574
        %v576 = vpop.f32.mrb[0].mxu0
        %577 = vmatprep.mubr.bf16.mxu0 0
        %578 = vmatmul.mubr.bf16.gmra.mrb[0].mxu0 %v432
        %v579 = vpop.f32.mrb[0].mxu0
        %v580 = vadd.f32 0.0, %v579
        %v581 = vpop.f32.mrb[0].mxu0
        %v582 = vpop.f32.mrb[0].mxu0
        %v583 = vadd.f32 0.0, %v582
        %v584 = vpop.f32.mrb[0].mxu0
        %585 = vdwg.mxu0
        %v586 = vadd.f32 %v345, %v524
        %v587 = vadd.f32 %v346, %v527
        %v588 = vadd.f32 %v347, %v532
        %v589 = vadd.f32 %v348, %v535
        %v590 = vadd.f32 %v349, %v540
        %v591 = vadd.f32 %v350, %v543
        %v592 = vadd.f32 %v351, %v548
        %v593 = vadd.f32 %v352, %v551
        %v594 = vadd.f32 %v353, %v556
        %v595 = vadd.f32 %v354, %v559
        %v596 = vadd.f32 %v355, %v564
        %v597 = vadd.f32 %v356, %v567
        %v598 = vadd.f32 %v357, %v572
        %v599 = vadd.f32 %v358, %v575
        %v600 = vadd.f32 %v359, %v580
        %v601 = vadd.f32 %v360, %v583
        %602 = vst [vmem:[#allocation2] sm:$0xff] %v586
        %603 = vst [vmem:[#allocation2 + $0x8] sm:$0xff] %v587
        %604 = vst [vmem:[#allocation2 + $0x10] sm:$0xff] %v588
        %605 = vst [vmem:[#allocation2 + $0x18] sm:$0xff] %v589
        %606 = vst [vmem:[#allocation2 + $0x20] sm:$0xff] %v590
        %607 = vst [vmem:[#allocation2 + $0x28] sm:$0xff] %v591
        %608 = vst [vmem:[#allocation2 + $0x30] sm:$0xff] %v592
        %609 = vst [vmem:[#allocation2 + $0x38] sm:$0xff] %v593
        %610 = vst [vmem:[#allocation2 + $0x40] sm:$0xff] %v594
        %611 = vst [vmem:[#allocation2 + $0x48] sm:$0xff] %v595
        %612 = vst [vmem:[#allocation2 + $0x50] sm:$0xff] %v596
        %613 = vst [vmem:[#allocation2 + $0x58] sm:$0xff] %v597
        %614 = vst [vmem:[#allocation2 + $0x60] sm:$0xff] %v598
        %615 = vst [vmem:[#allocation2 + $0x68] sm:$0xff] %v599
        %616 = vst [vmem:[#allocation2 + $0x70] sm:$0xff] %v600
        %617 = vst [vmem:[#allocation2 + $0x78] sm:$0xff] %v601
        %p618 = scmp.eq.s32.totalorder %s30, 8
        %p619 = pnand %p618, %p324
        %p620 = pneg %p619
        // Predicated region
        $region49: #{tpu_custom_call.1} parent=35 // pred_check
          _
        $region50: #{tpu_custom_call.1} parent=35 // pred_check_branch
          %622 = sbr.rel (%p619) target = $region52
        $region51: #{tpu_custom_call.1} parent=35 // pred_region
          %v623 = vld [vmem:[#allocation2] sm:$0xff]
          %v624 = vld [vmem:[#allocation2 + $0x8] sm:$0xff]
          %v625 = vld [vmem:[#allocation2 + $0x10] sm:$0xff]
          %v626 = vld [vmem:[#allocation2 + $0x18] sm:$0xff]
          %v627 = vld [vmem:[#allocation2 + $0x20] sm:$0xff]
          %v628 = vld [vmem:[#allocation2 + $0x28] sm:$0xff]
          %v629 = vld [vmem:[#allocation2 + $0x30] sm:$0xff]
          %v630 = vld [vmem:[#allocation2 + $0x38] sm:$0xff]
          %v631 = vld [vmem:[#allocation2 + $0x40] sm:$0xff]
          %v632 = vld [vmem:[#allocation2 + $0x48] sm:$0xff]
          %v633 = vld [vmem:[#allocation2 + $0x50] sm:$0xff]
          %v634 = vld [vmem:[#allocation2 + $0x58] sm:$0xff]
          %v635 = vld [vmem:[#allocation2 + $0x60] sm:$0xff]
          %v636 = vld [vmem:[#allocation2 + $0x68] sm:$0xff]
          %v637 = vld [vmem:[#allocation2 + $0x70] sm:$0xff]
          %v638 = vld [vmem:[#allocation2 + $0x78] sm:$0xff]
          %v639 = vld [vmem:[%s317] sm:$0x1]
          %v641 = vlaneseq
          %v642 = vshrl.u32 %v641, 7
          %v643 = vsub.s32 0, %v642
          %v644 = vrot.slane %v639, %v643
          %v646 = vmul.f32 %v623, %v644
          %v647 = vmul.f32 %v624, %v644
          %v648 = vmul.f32 %v625, %v644
          %v649 = vmul.f32 %v626, %v644
          %v650 = vmul.f32 %v627, %v644
          %v651 = vmul.f32 %v628, %v644
          %v652 = vmul.f32 %v629, %v644
          %v653 = vmul.f32 %v630, %v644
          %v654 = vmul.f32 %v631, %v644
          %v655 = vmul.f32 %v632, %v644
          %v656 = vmul.f32 %v633, %v644
          %v657 = vmul.f32 %v634, %v644
          %v658 = vmul.f32 %v635, %v644
          %v659 = vmul.f32 %v636, %v644
          %v660 = vmul.f32 %v637, %v644
          %v661 = vmul.f32 %v638, %v644
          %v662 = vld [vmem:[%s320] sm:$0x1]
          %v664 = vlaneseq
          %v665 = vshrl.u32 %v664, 7
          %v666 = vsub.s32 0, %v665
          %v667 = vrot.slane %v662, %v666
          %v669 = vadd.f32 %v646, %v667
          %v670 = vadd.f32 %v647, %v667
          %v671 = vadd.f32 %v648, %v667
          %v672 = vadd.f32 %v649, %v667
          %v673 = vadd.f32 %v650, %v667
          %v674 = vadd.f32 %v651, %v667
          %v675 = vadd.f32 %v652, %v667
          %v676 = vadd.f32 %v653, %v667
          %v677 = vadd.f32 %v654, %v667
          %v678 = vadd.f32 %v655, %v667
          %v679 = vadd.f32 %v656, %v667
          %v680 = vadd.f32 %v657, %v667
          %v681 = vadd.f32 %v658, %v667
          %v682 = vadd.f32 %v659, %v667
          %v683 = vadd.f32 %v660, %v667
          %v684 = vadd.f32 %v661, %v667
          %v685 = vmax.f32 %v669, 0.0
          %v686 = vmax.f32 %v670, 0.0
          %v687 = vmax.f32 %v671, 0.0
          %v688 = vmax.f32 %v672, 0.0
          %v689 = vmax.f32 %v673, 0.0
          %v690 = vmax.f32 %v674, 0.0
          %v691 = vmax.f32 %v675, 0.0
          %v692 = vmax.f32 %v676, 0.0
          %v693 = vmax.f32 %v677, 0.0
          %v694 = vmax.f32 %v678, 0.0
          %v695 = vmax.f32 %v679, 0.0
          %v696 = vmax.f32 %v680, 0.0
          %v697 = vmax.f32 %v681, 0.0
          %v698 = vmax.f32 %v682, 0.0
          %v699 = vmax.f32 %v683, 0.0
          %v700 = vmax.f32 %v684, 0.0
          %701 = vst [vmem:[#allocation8] sm:$0xff] %v685
          %702 = vst [vmem:[#allocation8 + $0x8] sm:$0xff] %v686
          %703 = vst [vmem:[#allocation8 + $0x10] sm:$0xff] %v687
          %704 = vst [vmem:[#allocation8 + $0x18] sm:$0xff] %v688
          %705 = vst [vmem:[#allocation8 + $0x20] sm:$0xff] %v689
          %706 = vst [vmem:[#allocation8 + $0x28] sm:$0xff] %v690
          %707 = vst [vmem:[#allocation8 + $0x30] sm:$0xff] %v691
          %708 = vst [vmem:[#allocation8 + $0x38] sm:$0xff] %v692
          %709 = vst [vmem:[#allocation8 + $0x40] sm:$0xff] %v693
          %710 = vst [vmem:[#allocation8 + $0x48] sm:$0xff] %v694
          %711 = vst [vmem:[#allocation8 + $0x50] sm:$0xff] %v695
          %712 = vst [vmem:[#allocation8 + $0x58] sm:$0xff] %v696
          %713 = vst [vmem:[#allocation8 + $0x60] sm:$0xff] %v697
          %714 = vst [vmem:[#allocation8 + $0x68] sm:$0xff] %v698
          %715 = vst [vmem:[#allocation8 + $0x70] sm:$0xff] %v699
          %716 = vst [vmem:[#allocation8 + $0x78] sm:$0xff] %v700
        $region52: #{tpu_custom_call.1} parent=35 // pred_fallthru
          _
        // Predicated region
        $region53: #{tpu_custom_call.1} parent=35 // pred_check
          %p717 = pneg %p180
        $region54: #{tpu_custom_call.1} parent=35 // pred_check_branch
          %719 = sbr.rel (%p717) target = $region56
        $region55: #{tpu_custom_call.1} parent=35 // pred_region
          %s720 = smul.u32 16, %s28
          %s722 = ssub.s32 2048, 2048
          %723 = vsyncadd [#allocation5], %s722
          %s724 = sadd.s32 %s29, %s720
          %s725 = smul.addr %s724, 128
          %s726 = scalar_lea.hbm %s4, %s725
          %s727 = sshll.u32 [#allocation8], 4
          %s728 = int_to_ptr.vmem [resolvable:$true] %s727
          %733 = dma.vmem_to_hbm [thread:$0]  %s728, 2048, %s726, [#allocation5], 128, 128, 8
        $region56: #{tpu_custom_call.1} parent=35 // pred_fallthru
          _
        // Predicated region
        $region57: #{tpu_custom_call.1} parent=35 // pred_check
          %p734 = pneg %p180
        $region58: #{tpu_custom_call.1} parent=35 // pred_check_branch
          %736 = sbr.rel (%p734) target = $region60
        $region59: #{tpu_custom_call.1} parent=35 // pred_region
          %737 = dma.done [#allocation5], 2048
        $region60: #{tpu_custom_call.1} parent=35 // pred_fallthru
          _
      $region36: #{tpu_custom_call.1} parent=5 // pred_fallthru
        _
      %p738 = scmp.le.s32.totalorder 2, %s17
      // Predicated region
      $region61: #{tpu_custom_call.1} parent=5 // pred_check
        %p739 = pneg %p738
      $region62: #{tpu_custom_call.1} parent=5 // pred_check_branch
        %741 = sbr.rel (%p739) target = $region64
      $region63: #{tpu_custom_call.1} parent=5 // pred_region
        %s742 = ssub.s32 %s17, 2
      $region64: #{tpu_custom_call.1} parent=5 // pred_fallthru
        _
    $region6: #{tpu_custom_call.1} parent=1 // loop_footer
      %s21 = sadd.s32 1, %s17
    $region7: #{tpu_custom_call.1} parent=1 // loop_footer_branch
      %16 = sbr.rel target = $region3
    $region8: #{tpu_custom_call.1} parent=1 // loop_exit
      _
    %743 = vsyncpa [#allocation4], 1
    %s744 = scalar_lea.sflag [#allocation4], 1
    %745 = vsyncpa %s744, 1
    %746 = vsyncpa [#allocation7], 1
    %s747 = scalar_lea.sflag [#allocation7], 1
    %748 = vsyncpa %s747, 1
    %749 = vsyncpa [#allocation5], 1
    %s750 = scalar_lea.sflag [#allocation5], 1
    %751 = vsyncpa %s750, 1

</llo_original>
